<compile_context>
chip_gen: v7x
topology: tpu7x:2x2x1
jax: 0.10.0
libtpu: 0.0.40
codegen_flags: <defaults>
</compile_context>

<pallas_src>
import jax
import jax.numpy as jnp
from jax.experimental import pallas as pl
from jax.experimental.pallas import tpu as pltpu

_LANES = 128      # vreg lane width (last dim)
_SUBLANES = 8     # vreg sublane height (second-to-last dim)
_MAX_TILE_ROWS = 1024  # 1024x128 f32 = 512 KiB / operand block


def _mul_kernel(x2_ref, x3_ref, o_ref):
    # Elementwise hot path: x1 = x2 * x3. Single unmasked store per block.
    o_ref[...] = x2_ref[...] * x3_ref[...]


def _round_up(x, m):
    return ((x + m - 1) // m) * m


def model_forward(input_tensor, x2, x3):
    """Mirrors Model.forward: ignores `input_tensor`, returns x2 * x3."""
    del input_tensor  # unused by the original forward

    # Match jnp dtype-promotion semantics if x2 / x3 ever differ in dtype.
    out_dtype = jnp.promote_types(x2.dtype, x3.dtype)
    a = x2.astype(out_dtype)
    b = x3.astype(out_dtype)

    orig_shape = a.shape
    n = a.size

    # Lane-dense layout: flatten -> (rows, 128), rows padded so the grid
    # divides evenly and every block is an exact (tile_rows, 128) tile.
    rows = max(pl.cdiv(n, _LANES), 1)
    tile_rows = min(_MAX_TILE_ROWS, _round_up(rows, _SUBLANES))
    padded_rows = _round_up(rows, tile_rows)
    padded_n = padded_rows * _LANES

    a2 = jnp.pad(a.reshape(-1), (0, padded_n - n)).reshape(padded_rows, _LANES)
    b2 = jnp.pad(b.reshape(-1), (0, padded_n - n)).reshape(padded_rows, _LANES)

    grid = (padded_rows // tile_rows,)
    spec = pl.BlockSpec((tile_rows, _LANES), lambda i: (i, 0))

    out_padded = pl.pallas_call(
        _mul_kernel,
        out_shape=jax.ShapeDtypeStruct((padded_rows, _LANES), out_dtype),
        grid=grid,
        in_specs=[spec, spec],
        out_specs=spec,
        compiler_params=pltpu.CompilerParams(
            dimension_semantics=("parallel",)
        ),
    )(a2, b2)

    # Strip padding (pad region is 0*0 = 0, discarded) and restore shape.
    return out_padded.reshape(-1)[:n].reshape(orig_shape)


if __name__ == "__main__":
    key = jax.random.PRNGKey(0)
    k_in, k2, k3, k4, k5 = jax.random.split(key, 5)

    # Shapes from the module spec: torch.randn(1, 2, 2).
    input_tensor = jax.random.normal(k_in, (1, 2, 2), dtype=jnp.float32)
    x2 = jax.random.normal(k2, (1, 2, 2), dtype=jnp.float32)
    x3 = jax.random.normal(k3, (1, 2, 2), dtype=jnp.float32)

    out = model_forward(input_tensor, x2, x3)
    out = jax.block_until_ready(out)

    ref = x2 * x3
    assert out.shape == (1, 2, 2)
    assert out.dtype == ref.dtype
    assert jnp.allclose(out, ref, atol=1e-6, rtol=1e-6)

    # Also exercise the multi-tile grid path (3072 rows of 128 -> grid of 3).
    big2 = jax.random.normal(k4, (4, 384, 256), dtype=jnp.float32)
    big3 = jax.random.normal(k5, (4, 384, 256), dtype=jnp.float32)
    big_out = jax.block_until_ready(model_forward(None, big2, big3))
    assert big_out.shape == big2.shape
    assert jnp.allclose(big_out, big2 * big3, atol=1e-6, rtol=1e-6)

    print("KERNEL_OK")
</pallas_src>

<mosaic_0001>
module attributes {stable_mosaic.version = 11 : i64} {
  func.func @_mul_kernel(%arg0: i32, %arg1: memref<8x128xf32, #tpu.memory_space<vmem>>, %arg2: memref<8x128xf32, #tpu.memory_space<vmem>>, %arg3: memref<8x128xf32, #tpu.memory_space<vmem>>) attributes {dimension_semantics = [#tpu.dimension_semantics<parallel>], iteration_bounds = array<i64: 1>, scalar_prefetch = 0 : i64, scratch_operands = 0 : i64, tpu.core_type = #tpu.core_type<tc>, window_params = [{transform_indices = @transform_0, window_bounds = array<i64: 8, 128>}, {transform_indices = @transform_1, window_bounds = array<i64: 8, 128>}, {transform_indices = @transform_2, window_bounds = array<i64: 8, 128>}]} {
    %c0 = arith.constant 0 : index
    %c0_0 = arith.constant 0 : index
    %0 = vector.load %arg1[%c0, %c0_0] : memref<8x128xf32, #tpu.memory_space<vmem>>, vector<8x128xf32>
    %c0_1 = arith.constant 0 : index
    %c0_2 = arith.constant 0 : index
    %1 = vector.load %arg2[%c0_1, %c0_2] : memref<8x128xf32, #tpu.memory_space<vmem>>, vector<8x128xf32>
    %2 = arith.mulf %0, %1 : vector<8x128xf32>
    %c0_3 = arith.constant 0 : index
    %c0_4 = arith.constant 0 : index
    %3 = vector.load %arg3[%c0_3, %c0_4] : memref<8x128xf32, #tpu.memory_space<vmem>>, vector<8x128xf32>
    tpu.vector_store %arg3[%c0_3, %c0_4], %2 {strides = array<i32>} : memref<8x128xf32, #tpu.memory_space<vmem>>, vector<8x128xf32>,
    return
  }
  func.func @transform_0(%arg0: i32) -> (i32, i32) {
    %c0_i32 = arith.constant 0 : i32
    %c0_i32_0 = arith.constant 0 : i32
    return %arg0, %c0_i32 : i32, i32
  }
  func.func @transform_1(%arg0: i32) -> (i32, i32) {
    %c0_i32 = arith.constant 0 : i32
    %c0_i32_0 = arith.constant 0 : i32
    return %arg0, %c0_i32 : i32, i32
  }
  func.func @transform_2(%arg0: i32) -> (i32, i32) {
    %c0_i32 = arith.constant 0 : i32
    %c0_i32_0 = arith.constant 0 : i32
    return %arg0, %c0_i32 : i32, i32
  }
}

</mosaic_0001>

<llo_original>
// kernel: tpu_custom_call.1
$region0: #{tpu_custom_call.1}
  #allocation0 [shape = 'u32[]', space=smem, size = 0x4, offset = 0x4, fixed_abs, tag = 'smem constant byte address 0x4 - core index']
  #allocation1 [shape = 'u32[144,128]{1,0:T(1,128)}', space=vmem, size = 0x12000, scoped, tag = 'internal scratch']
  %s0 = inlined_call_operand.hbm [shape: f32[8,128], index: 0, kind: input, shape index: {}]
  %s1 = inlined_call_operand.hbm [shape: f32[8,128], index: 1, kind: input, shape index: {}]
  %s2 = inlined_call_operand.hbm [shape: f32[8,128], index: 2, kind: output, shape index: {}]
  %s3 = sld [smem:[#allocation0]]
  $region26: #{tpu_custom_call.1} parent=0
    _
  %s5 = ssub.s32 1, %s3
  %s6 = scalar_select 0, %s5, %s3
  $region1: #{tpu_custom_call.1} parent=0
    #allocation2 [shape = 'u8[4096]{0}', space=vmem, size = 0x1000, scoped, tag = 'input window, operand 0, single buffered']
    #allocation3 [shape = 's32[1]{0}', space=sflag, size = 0x4, scoped, tag = 'scoped memory for tpu_custom_call.1']
    #allocation4 [shape = 's32[1]{0}', space=sflag, size = 0x4, scoped, tag = 'scoped memory for tpu_custom_call.1']
    #allocation5 [shape = 'u8[4096]{0}', space=vmem, size = 0x1000, scoped, tag = 'input window, operand 1, single buffered']
    #allocation6 [shape = 's32[1]{0}', space=sflag, size = 0x4, scoped, tag = 'scoped memory for tpu_custom_call.1']
    #allocation7 [shape = 'u8[4096]{0}', space=vmem, size = 0x1000, scoped, tag = 'output window, operand 0, single buffered']
    %7 = vsyncpa [#allocation3], 0
    %8 = vsyncpa [#allocation6], 0
    %9 = vsyncpa [#allocation4], 0
    // Predicated region
    $region2: #{tpu_custom_call.1} parent=1 // pred_check
      _
    $region3: #{tpu_custom_call.1} parent=1 // pred_check_branch
      %11 = sbr.rel (0) target = $region5
    $region4: #{tpu_custom_call.1} parent=1 // pred_region
      %s13 = ssub.s32 128, 128
      %14 = vsyncadd [#allocation3], %s13
      %s16 = sshll.u32 [#allocation2], 4
      %s17 = int_to_ptr.vmem [resolvable:$true] %s16
      %19 = dma.hbm_to_vmem [thread:$0]  %s0, 128, %s17, [#allocation3]
    $region5: #{tpu_custom_call.1} parent=1 // pred_fallthru
      _
    // Predicated region
    $region6: #{tpu_custom_call.1} parent=1 // pred_check
      _
    $region7: #{tpu_custom_call.1} parent=1 // pred_check_branch
      %21 = sbr.rel (0) target = $region9
    $region8: #{tpu_custom_call.1} parent=1 // pred_region
      %s23 = ssub.s32 128, 128
      %24 = vsyncadd [#allocation6], %s23
      %s26 = sshll.u32 [#allocation5], 4
      %s27 = int_to_ptr.vmem [resolvable:$true] %s26
      %29 = dma.hbm_to_vmem [thread:$0]  %s1, 128, %s27, [#allocation6]
    $region9: #{tpu_custom_call.1} parent=1 // pred_fallthru
      _
    // Predicated region
    $region10: #{tpu_custom_call.1} parent=1 // pred_check
      _
    $region11: #{tpu_custom_call.1} parent=1 // pred_check_branch
      %31 = sbr.rel (0) target = $region13
    $region12: #{tpu_custom_call.1} parent=1 // pred_region
      %32 = dma.done [#allocation3], 128
    $region13: #{tpu_custom_call.1} parent=1 // pred_fallthru
      _
    // Predicated region
    $region14: #{tpu_custom_call.1} parent=1 // pred_check
      _
    $region15: #{tpu_custom_call.1} parent=1 // pred_check_branch
      %34 = sbr.rel (0) target = $region17
    $region16: #{tpu_custom_call.1} parent=1 // pred_region
      %35 = dma.done [#allocation6], 128
    $region17: #{tpu_custom_call.1} parent=1 // pred_fallthru
      _
    %v36 = vld [vmem:[#allocation2] sm:$0xff]
    %v37 = vld [vmem:[#allocation5] sm:$0xff]
    %v38 = vmul.f32 %v36, %v37
    %39 = vst [vmem:[#allocation7] sm:$0xff] %v38
    // Predicated region
    $region18: #{tpu_custom_call.1} parent=1 // pred_check
      _
    $region19: #{tpu_custom_call.1} parent=1 // pred_check_branch
      %41 = sbr.rel (0) target = $region21
    $region20: #{tpu_custom_call.1} parent=1 // pred_region
      %s43 = ssub.s32 128, 128
      %44 = vsyncadd [#allocation4], %s43
      %s46 = sshll.u32 [#allocation7], 4
      %s47 = int_to_ptr.vmem [resolvable:$true] %s46
      %49 = dma.vmem_to_hbm [thread:$0]  %s47, 128, %s2, [#allocation4]
    $region21: #{tpu_custom_call.1} parent=1 // pred_fallthru
      _
    // Predicated region
    $region22: #{tpu_custom_call.1} parent=1 // pred_check
      _
    $region23: #{tpu_custom_call.1} parent=1 // pred_check_branch
      %51 = sbr.rel (0) target = $region25
    $region24: #{tpu_custom_call.1} parent=1 // pred_region
      %52 = dma.done [#allocation4], 128
    $region25: #{tpu_custom_call.1} parent=1 // pred_fallthru
      _
    %53 = vsyncpa [#allocation3], 1
    %54 = vsyncpa [#allocation6], 1
    %55 = vsyncpa [#allocation4], 1

</llo_original>
